<compile_context>
chip_gen: v7x
topology: tpu7x:2x2x1
jax: 0.10.0
libtpu: 0.0.40
codegen_flags: <defaults>
</compile_context>

<pallas_src>
import jax
import jax.numpy as jnp
from jax.experimental import pallas as pl
from jax.experimental.pallas import tpu as pltpu


# ----------------------------------------------------------------------------
# Kernels.  Refs present 2-D (rows, K) tiles (leading size-1 dims squeezed).
# Compute is f32 — required by the module (F.softmax(..., dtype=float32)).
# ----------------------------------------------------------------------------
def _softmax_kernel(x_ref, o_ref):
    x = x_ref[...].astype(jnp.float32)
    m = jnp.max(x, axis=-1, keepdims=True)
    e = jnp.exp(x - m)
    s = jnp.sum(e, axis=-1, keepdims=True)
    # One EUP reciprocal per row + VPU multiply (instead of a full-width divide).
    o_ref[...] = (e * pl.reciprocal(s, approx=True)).astype(o_ref.dtype)


def _make_masked_softmax_kernel(min_val):
    # min_val = finfo(promote_types(attn, mask)).min, baked in at trace time.
    def kernel(x_ref, mask_ref, o_ref):
        # Mask arrives in its native dtype; upcast to f32 only here.
        x = x_ref[...].astype(jnp.float32) + mask_ref[...].astype(jnp.float32)
        x = jnp.maximum(x, min_val)
        m = jnp.max(x, axis=-1, keepdims=True)
        e = jnp.exp(x - m)
        s = jnp.sum(e, axis=-1, keepdims=True)
        o_ref[...] = (e * pl.reciprocal(s, approx=True)).astype(o_ref.dtype)
    return kernel


# ----------------------------------------------------------------------------
# Generation-aware sizing helpers.
# ----------------------------------------------------------------------------
def _vmem_capacity_bytes():
    try:
        return int(pltpu.get_tpu_info().vmem_capacity_bytes)
    except Exception:
        return 64 * 1024 * 1024          # conservative default (v7x per-core VMEM)


def _choose_row_block(rows, K, in_isz, out_isz, mask_isz=0):
    """Row tile (multiple of 8) sized against a VMEM budget.

    Counts the double-buffered in/out(/mask) DMA tiles *and* the f32
    intermediates (x, e live at 4 B/elem regardless of input dtype).
    """
    if rows <= 8:
        return rows                      # full-extent block is always legal
    vmem = _vmem_capacity_bytes()
    budget = vmem // 4                   # leave compiler-scratch headroom
    bytes_per_row = K * (2 * in_isz + 2 * out_isz + 2 * mask_isz   # 2x: double buffers
                         + 2 * 4)                                  # f32 temps (x, e)
    rb = budget // max(bytes_per_row, 1)
    rb = min(rb, 4096, rows)
    if vmem <= 64 * 1024 * 1024 and rows >= 16:
        # 64 MiB parts (v7x) have 2 TensorCores sharing the grid: keep >= 2 steps.
        rb = min(rb, rows // 2)
    return max(8, (rb // 8) * 8)


def _compiler_params(dimension_semantics):
    vmem = _vmem_capacity_bytes()
    return pltpu.CompilerParams(
        dimension_semantics=dimension_semantics,
        vmem_limit_bytes=(vmem * 3) // 4,    # 48 MiB on v7x, 96 MiB on v5e/v6e
    )


# ----------------------------------------------------------------------------
# Wrapper.
# ----------------------------------------------------------------------------
def quant_softmax(attn_weights, attention_mask=None):
    """Softmax over the last dim in f32, cast back to input dtype.

    attn_weights: (..., K).  attention_mask: optional additive mask
    broadcastable to attn_weights (typically (B, 1, Q, K))."""
    orig_shape = attn_weights.shape
    K = orig_shape[-1]
    out_dtype = attn_weights.dtype
    in_isz = jnp.dtype(attn_weights.dtype).itemsize
    out_isz = in_isz

    # ---------------- unmasked path: flatten to (rows, K) --------------------
    if attention_mask is None:
        rows = 1
        for d in orig_shape[:-1]:
            rows *= d
        x2 = attn_weights.reshape(rows, K)
        rb = _choose_row_block(rows, K, in_isz, out_isz)
        out = pl.pallas_call(
            _softmax_kernel,
            out_shape=jax.ShapeDtypeStruct((rows, K), out_dtype),
            grid_spec=pltpu.PrefetchScalarGridSpec(
                num_scalar_prefetch=0,
                grid=(pl.cdiv(rows, rb),),
                in_specs=[pl.BlockSpec((rb, K), lambda i: (i, 0))],
                out_specs=pl.BlockSpec((rb, K), lambda i: (i, 0)),
            ),
            compiler_params=_compiler_params(("parallel",)),
        )(x2)
        return out.reshape(orig_shape)

    # ---------------- masked path --------------------------------------------
    mask = attention_mask                      # native dtype — no wrapper cast
    prom = jnp.promote_types(attn_weights.dtype, mask.dtype)
    if not jnp.issubdtype(prom, jnp.floating):
        prom = jnp.float32
    min_val = float(jnp.finfo(prom).min)
    kernel = _make_masked_softmax_kernel(min_val)
    m_isz = jnp.dtype(mask.dtype).itemsize

    head_reuse = (
        attn_weights.ndim == 4 and mask.ndim == 4
        and mask.shape[1] == 1 and mask.shape[3] == K
        and mask.shape[0] in (1, orig_shape[0])
        and mask.shape[2] in (1, orig_shape[2])
        and orig_shape[1] > 1
    )

    if head_reuse:
        # (B, NH, Q, K) attn with a head-broadcast mask: grid (B, Qblocks, NH),
        # head axis innermost.  The mask index_map ignores the head index, so
        # consecutive grid steps request the SAME mask block and Pallas skips
        # the re-fetch -> the mask is read from HBM once per (b, q) tile.
        B, NH, Q, _ = orig_shape
        mb, _, mq, _ = mask.shape
        tq = _choose_row_block(Q, K, in_isz, out_isz, m_isz)
        tq_mask = tq if mq == Q else 1

        def x_map(b, q, h):
            return (b, h, q, 0)

        def mask_map(b, q, h):
            return (b if mb == B else 0, 0, q if mq == Q else 0, 0)

        out = pl.pallas_call(
            kernel,
            out_shape=jax.ShapeDtypeStruct(orig_shape, out_dtype),
            grid_spec=pltpu.PrefetchScalarGridSpec(
                num_scalar_prefetch=0,
                grid=(B, pl.cdiv(Q, tq), NH),
                in_specs=[
                    pl.BlockSpec((None, None, tq, K), x_map),
                    pl.BlockSpec((None, None, tq_mask, K), mask_map),
                ],
                out_specs=pl.BlockSpec((None, None, tq, K), x_map),
            ),
            compiler_params=_compiler_params(("parallel", "parallel", "arbitrary")),
        )(attn_weights, mask)
        return out

    # Fallback: mask already full-shape (or an unusual broadcast pattern).
    rows = 1
    for d in orig_shape[:-1]:
        rows *= d
    if mask.shape != orig_shape:
        # TODO(synk): rare broadcast layouts still materialize the mask here.
        mask = jnp.broadcast_to(mask, orig_shape)
    x2 = attn_weights.reshape(rows, K)
    m2 = mask.reshape(rows, K)
    rb = _choose_row_block(rows, K, in_isz, out_isz, m_isz)
    out = pl.pallas_call(
        kernel,
        out_shape=jax.ShapeDtypeStruct((rows, K), out_dtype),
        grid_spec=pltpu.PrefetchScalarGridSpec(
            num_scalar_prefetch=0,
            grid=(pl.cdiv(rows, rb),),
            in_specs=[pl.BlockSpec((rb, K), lambda i: (i, 0)),
                      pl.BlockSpec((rb, K), lambda i: (i, 0))],
            out_specs=pl.BlockSpec((rb, K), lambda i: (i, 0)),
        ),
        compiler_params=_compiler_params(("parallel",)),
    )(x2, m2)
    return out.reshape(orig_shape)


if __name__ == "__main__":
    key = jax.random.PRNGKey(0)
    kx, km = jax.random.split(key)

    # Attention-weight shape: (batch=2, heads=4, q_len=8, kv_len=32)
    B, NH, Q, K = 2, 4, 8, 32
    attn = jax.random.normal(kx, (B, NH, Q, K), dtype=jnp.float32)

    # Tolerance is set by the approximate EUP reciprocal (~1e-4 relative),
    # not by the softmax math itself.
    TOL = dict(atol=2e-3, rtol=2e-3)

    # Default module configuration: no mask, use_act_quant=False -> plain softmax.
    out = quant_softmax(attn)
    jax.block_until_ready(out)
    ref = jax.nn.softmax(attn.astype(jnp.float32), axis=-1).astype(attn.dtype)
    assert jnp.allclose(out, ref, **TOL)

    # Masked branch: additive 0 / -1e9 mask of shape (B, 1, Q, K).
    mask = jnp.where(jax.random.uniform(km, (B, 1, Q, K)) > 0.5,
                     0.0, -1e9).astype(jnp.float32)
    out_m = quant_softmax(attn, mask)
    jax.block_until_ready(out_m)
    w = attn + mask
    w = jnp.maximum(w, jnp.finfo(attn.dtype).min)
    ref_m = jax.nn.softmax(w.astype(jnp.float32), axis=-1).astype(attn.dtype)
    assert jnp.allclose(out_m, ref_m, **TOL)

    print("KERNEL_OK")
</pallas_src>

<mosaic_0001>
module attributes {stable_mosaic.version = 11 : i64} {
  func.func @_softmax_kernel(%arg0: i32, %arg1: memref<32x32xf32, #tpu.memory_space<vmem>>, %arg2: memref<32x32xf32, #tpu.memory_space<vmem>>) attributes {dimension_semantics = [#tpu.dimension_semantics<parallel>], iteration_bounds = array<i64: 2>, scalar_prefetch = 0 : i64, scratch_operands = 0 : i64, tpu.core_type = #tpu.core_type<tc>, window_params = [{transform_indices = @transform_0, window_bounds = array<i64: 32, 32>}, {transform_indices = @transform_1, window_bounds = array<i64: 32, 32>}]} {
    %c0 = arith.constant 0 : index
    %c0_0 = arith.constant 0 : index
    %0 = vector.load %arg1[%c0, %c0_0] : memref<32x32xf32, #tpu.memory_space<vmem>>, vector<32x32xf32>
    %cst = arith.constant dense<0xFF800000> : vector<32xf32>
    %1 = vector.multi_reduction <maximumf>, %0, %cst [1] : vector<32x32xf32> to vector<32xf32>
    %2 = vector.shape_cast %1 : vector<32xf32> to vector<32x1xf32>
    %3 = vector.broadcast %2 : vector<32x1xf32> to vector<32x32xf32>
    %4 = arith.subf %0, %3 : vector<32x32xf32>
    %5 = math.exp %4 : vector<32x32xf32>
    %cst_1 = arith.constant dense<0.000000e+00> : vector<32xf32>
    %6 = vector.multi_reduction <add>, %5, %cst_1 [1] : vector<32x32xf32> to vector<32xf32>
    %7 = vector.shape_cast %6 : vector<32xf32> to vector<32x1xf32>
    %8 = tpu.reciprocal %7 {approx = true} : vector<32x1xf32> -> vector<32x1xf32>
    %9 = vector.broadcast %8 : vector<32x1xf32> to vector<32x32xf32>
    %10 = arith.mulf %5, %9 : vector<32x32xf32>
    %c0_2 = arith.constant 0 : index
    %c0_3 = arith.constant 0 : index
    %11 = vector.load %arg2[%c0_2, %c0_3] : memref<32x32xf32, #tpu.memory_space<vmem>>, vector<32x32xf32>
    tpu.vector_store %arg2[%c0_2, %c0_3], %10 {strides = array<i32>} : memref<32x32xf32, #tpu.memory_space<vmem>>, vector<32x32xf32>,
    return
  }
  func.func @transform_0(%arg0: i32) -> (i32, i32) {
    %c0_i32 = arith.constant 0 : i32
    %c0_i32_0 = arith.constant 0 : i32
    return %arg0, %c0_i32 : i32, i32
  }
  func.func @transform_1(%arg0: i32) -> (i32, i32) {
    %c0_i32 = arith.constant 0 : i32
    %c0_i32_0 = arith.constant 0 : i32
    return %arg0, %c0_i32 : i32, i32
  }
}

</mosaic_0001>

<llo_original>
// kernel: tpu_custom_call.1
$region0: #{tpu_custom_call.1}
  #allocation0 [shape = 'u32[]', space=smem, size = 0x4, offset = 0x4, fixed_abs, tag = 'smem constant byte address 0x4 - core index']
  #allocation1 [shape = 'u32[144,128]{1,0:T(1,128)}', space=vmem, size = 0x12000, scoped, tag = 'internal scratch']
  %s0 = inlined_call_operand.vmem [shape: f32[64,32], index: 0, kind: input, shape index: {}]
  %s1 = inlined_call_operand.vmem [shape: f32[64,32], index: 1, kind: output, shape index: {}]
  %s2 = sld [smem:[#allocation0]]
  $region37: #{tpu_custom_call.1} parent=0
    _
  %s4 = ssub.s32 1, %s2
  %s5 = scalar_select 0, %s4, %s2
  loop: start=0, step=1, limit=4
  $region2: #{tpu_custom_call.1} parent=0 // loop_pre_header
    _
  $region3: #{tpu_custom_call.1} parent=0 // loop_header
    %s7 = sphi 0, %s11
    %p8 = scmp.ge.s32.totalorder %s7, 4
    %s17 = sphi 0, %s19
    %s20 = sphi 0, %s17
    %s21 = sphi 0, %s20
    %s37 = sphi 0, %s21
    %s43 = sphi 0, %s45
    %s46 = sphi 0, %s43
    %s47 = sphi 0, %s46
    %s63 = sphi 0, %s47
  $region4: #{tpu_custom_call.1} parent=0 // loop_header_branch
    %10 = sbr.rel (%p8) target = $region8
  $region5: #{tpu_custom_call.1} parent=0 // loop_body
    %s12 = ssub.s32 %s7, 1
    %s13 = ssub.s32 %s7, 2
    %s14 = sadd.s32 %s7, 1
    %s15 = ssub.s32 %s7, %s14
    %p16 = scmp.eq.s32.totalorder %s15, 0
    %s18 = sadd.s32 %s17, 1
    %s19 = scalar_select %p16, %s17, %s18
    %p22 = pneg %p16
    %p23 = scmp.eq.s32.totalorder %s7, 1
    %p24 = por %p22, %p23
    %p25 = scmp.ne.s32.totalorder %s17, %s20
    %p26 = scmp.eq.s32.totalorder %s7, 0
    %p27 = por %p25, %p26
    %p28 = scmp.ne.s32.totalorder %s17, %s20
    %p29 = scmp.eq.s32.totalorder %s12, 1
    %p30 = por %p28, %p29
    %p31 = scmp.ne.s32.totalorder %s20, %s21
    %p32 = scmp.eq.s32.totalorder %s12, 0
    %p33 = por %p31, %p32
    %p34 = scmp.ne.s32.totalorder %s20, %s21
    %p35 = scmp.eq.s32.totalorder %s13, 1
    %p36 = por %p34, %p35
    %p38 = scmp.ne.s32.totalorder %s21, %s37
    %p39 = scmp.eq.s32.totalorder %s13, 0
    %p40 = por %p38, %p39
    %s41 = ssub.s32 %s7, %s14
    %p42 = scmp.eq.s32.totalorder %s41, 0
    %s44 = sadd.s32 %s43, 1
    %s45 = scalar_select %p42, %s43, %s44
    %p48 = pneg %p42
    %p49 = scmp.eq.s32.totalorder %s7, 1
    %p50 = por %p48, %p49
    %p51 = scmp.ne.s32.totalorder %s43, %s46
    %p52 = scmp.eq.s32.totalorder %s7, 0
    %p53 = por %p51, %p52
    %p54 = scmp.ne.s32.totalorder %s43, %s46
    %p55 = scmp.eq.s32.totalorder %s12, 1
    %p56 = por %p54, %p55
    %p57 = scmp.ne.s32.totalorder %s46, %s47
    %p58 = scmp.eq.s32.totalorder %s12, 0
    %p59 = por %p57, %p58
    %p60 = scmp.ne.s32.totalorder %s46, %s47
    %p61 = scmp.eq.s32.totalorder %s13, 1
    %p62 = por %p60, %p61
    %p64 = scmp.ne.s32.totalorder %s47, %s63
    %p65 = scmp.eq.s32.totalorder %s13, 0
    %p66 = por %p64, %p65
    %p67 = scmp.le.s32.totalorder 1, %s7
    %p68 = scmp.lt.s32.totalorder %s7, 3
    %p69 = pnand %p67, %p68
    %p70 = pneg %p69
    // Predicated region
    $region9: #{tpu_custom_call.1} parent=5 // pred_check
      _
    $region10: #{tpu_custom_call.1} parent=5 // pred_check_branch
      %72 = sbr.rel (%p69) target = $region12
    $region11: #{tpu_custom_call.1} parent=5 // pred_region
      %s73 = ssub.s32 %s7, 1
    $region12: #{tpu_custom_call.1} parent=5 // pred_fallthru
      _
    %p74 = scmp.lt.s32.totalorder %s7, 2
    // Predicated region
    $region13: #{tpu_custom_call.1} parent=5 // pred_check
      %p75 = pneg %p74
    $region14: #{tpu_custom_call.1} parent=5 // pred_check_branch
      %77 = sbr.rel (%p75) target = $region16
    $region15: #{tpu_custom_call.1} parent=5 // pred_region
      // Predicated region
      $region17: #{tpu_custom_call.1} parent=15 // pred_check
        %p78 = pneg %p27
      $region18: #{tpu_custom_call.1} parent=15 // pred_check_branch
        %80 = sbr.rel (%p78) target = $region20
      $region19: #{tpu_custom_call.1} parent=15 // pred_region
        %s81 = smul.u32 4, %s7
        %p82 = scmp.lt.s32.totalorder %s81, 7
        %s83 = scalar_select %p82, %s81, 7
        %s84 = smul.addr %s83, 8
        %s85 = scalar_lea.vmem %s0, %s84
        %s86 = smul.u32 4, %s7
      $region20: #{tpu_custom_call.1} parent=15 // pred_fallthru
        _
    $region16: #{tpu_custom_call.1} parent=5 // pred_fallthru
      _
    %p87 = scmp.le.s32.totalorder 1, %s7
    %p88 = scmp.lt.s32.totalorder %s7, 3
    %p89 = pnand %p87, %p88
    %p90 = pneg %p89
    // Predicated region
    $region21: #{tpu_custom_call.1} parent=5 // pred_check
      _
    $region22: #{tpu_custom_call.1} parent=5 // pred_check_branch
      %92 = sbr.rel (%p89) target = $region24
    $region23: #{tpu_custom_call.1} parent=5 // pred_region
      %s93 = ssub.s32 %s7, 1
      %s94 = smul.u32 4, %s12
      %p95 = scmp.lt.s32.totalorder %s94, 7
      %s96 = scalar_select %p95, %s94, 7
      %s97 = smul.addr %s96, 8
      %s98 = scalar_lea.vmem %s0, %s97
      %p99 = pneg %p33
      %p100 = pneg %p30
      %p101 = pneg %p59
      %p102 = pneg %p56
      %s103 = smul.u32 4, %s12
      %p104 = scmp.lt.s32.totalorder %s103, 7
      %s105 = scalar_select %p104, %s103, 7
      %s106 = smul.addr %s105, 8
      %s107 = scalar_lea.vmem %s1, %s106
      %s108 = smul.u32 4, %s12
      %p109 = scmp.lt.s32.totalorder %s108, 7
      %s110 = scalar_select %p109, %s108, 7
      %s111 = smul.addr %s110, 8
      %s112 = scalar_lea.vmem %s0, %s111
      %s113 = smul.u32 4, %s12
      %s114 = smul.u32 4, %s12
      %p115 = scmp.lt.s32.totalorder %s114, 7
      %s116 = scalar_select %p115, %s114, 7
      %s117 = smul.addr %s116, 8
      %s118 = scalar_lea.vmem %s1, %s117
      %s119 = smul.u32 4, %s12
      %v120 = vld [vmem:[%s112] sm:$0xff]
      %v121 = vld [vmem:[%s112 + $0x8] sm:$0xff]
      %v122 = vld [vmem:[%s112 + $0x10] sm:$0xff]
      %v123 = vld [vmem:[%s112 + $0x18] sm:$0xff]
      %vm124 = vcmask 261120
      %v125 = vsel %vm124, %v120, -inf
      %126 = vmax.xlane.f32.xlu0 %v125
      %v127 = vpop.xlane.xlu0 %126
      %v128 = vsel %vm124, %v121, -inf
      %129 = vmax.xlane.f32.xlu0 %v128
      %v130 = vpop.xlane.xlu0 %129
      %v131 = vsel %vm124, %v122, -inf
      %132 = vmax.xlane.f32.xlu0 %v131
      %v133 = vpop.xlane.xlu0 %132
      %v134 = vsel %vm124, %v123, -inf
      %135 = vmax.xlane.f32.xlu0 %v134
      %v136 = vpop.xlane.xlu0 %135
      %v137 = vsub.f32 %v120, %v127
      %v138 = vsub.f32 %v121, %v130
      %v139 = vsub.f32 %v122, %v133
      %v140 = vsub.f32 %v123, %v136
      %v141 = vmul.f32 %v137, 1.442695
      %v142 = vpow.pop %v141
      %v143 = vmul.f32 %v138, 1.442695
      %v144 = vpow.pop %v143
      %v145 = vmul.f32 %v139, 1.442695
      %v146 = vpow.pop %v145
      %v147 = vmul.f32 %v140, 1.442695
      %v148 = vpow.pop %v147
      %v149 = vsel %vm124, %v142, 0.0
      %150 = vadd.xlane.f32.xlu0 %v149
      %v151 = vpop.xlane.xlu0 %150
      %v152 = vsel %vm124, %v144, 0.0
      %153 = vadd.xlane.f32.xlu0 %v152
      %v154 = vpop.xlane.xlu0 %153
      %v155 = vsel %vm124, %v146, 0.0
      %156 = vadd.xlane.f32.xlu0 %v155
      %v157 = vpop.xlane.xlu0 %156
      %v158 = vsel %vm124, %v148, 0.0
      %159 = vadd.xlane.f32.xlu0 %v158
      %v160 = vpop.xlane.xlu0 %159
      %v161 = vrcp.pop %v151
      %v162 = vrcp.pop %v154
      %v163 = vrcp.pop %v157
      %v164 = vrcp.pop %v160
      %v165 = vmul.f32 %v142, %v161
      %v166 = vmul.f32 %v144, %v162
      %v167 = vmul.f32 %v146, %v163
      %v168 = vmul.f32 %v148, %v164
      %169 = vst.msk [vmem:[%s118] sm:$0xff] %vm124, %v165
      %170 = vst.msk [vmem:[%s118 + $0x8] sm:$0xff] %vm124, %v166
      %171 = vst.msk [vmem:[%s118 + $0x10] sm:$0xff] %vm124, %v167
      %172 = vst.msk [vmem:[%s118 + $0x18] sm:$0xff] %vm124, %v168
      %s173 = smul.u32 4, %s12
      %p174 = scmp.lt.s32.totalorder %s173, 7
      %s175 = scalar_select %p174, %s173, 7
      %s176 = smul.addr %s175, 8
      %s177 = scalar_lea.vmem %s1, %s176
      // Predicated region
      $region25: #{tpu_custom_call.1} parent=23 // pred_check
        %p178 = pneg %p56
      $region26: #{tpu_custom_call.1} parent=23 // pred_check_branch
        %180 = sbr.rel (%p178) target = $region28
      $region27: #{tpu_custom_call.1} parent=23 // pred_region
        %s181 = smul.u32 4, %s12
      $region28: #{tpu_custom_call.1} parent=23 // pred_fallthru
        _
    $region24: #{tpu_custom_call.1} parent=5 // pred_fallthru
      _
    %p182 = scmp.le.s32.totalorder 2, %s7
    // Predicated region
    $region29: #{tpu_custom_call.1} parent=5 // pred_check
      %p183 = pneg %p182
    $region30: #{tpu_custom_call.1} parent=5 // pred_check_branch
      %185 = sbr.rel (%p183) target = $region32
    $region31: #{tpu_custom_call.1} parent=5 // pred_region
      %s186 = ssub.s32 %s7, 2
      // Predicated region
      $region33: #{tpu_custom_call.1} parent=31 // pred_check
        %p187 = pneg %p62
      $region34: #{tpu_custom_call.1} parent=31 // pred_check_branch
        %189 = sbr.rel (%p187) target = $region36
      $region35: #{tpu_custom_call.1} parent=31 // pred_region
        %s190 = smul.u32 4, %s13
        %p191 = scmp.lt.s32.totalorder %s190, 7
        %s192 = scalar_select %p191, %s190, 7
        %s193 = smul.addr %s192, 8
        %s194 = scalar_lea.vmem %s1, %s193
      $region36: #{tpu_custom_call.1} parent=31 // pred_fallthru
        _
    $region32: #{tpu_custom_call.1} parent=5 // pred_fallthru
      _
  $region6: #{tpu_custom_call.1} parent=0 // loop_footer
    %s11 = sadd.s32 1, %s7
  $region7: #{tpu_custom_call.1} parent=0 // loop_footer_branch
    %6 = sbr.rel target = $region3
  $region8: #{tpu_custom_call.1} parent=0 // loop_exit
    _

</llo_original>
